<compile_context>
chip_gen: v5e
topology: v5e:2x2
jax: 0.10.0
libtpu: 0.0.40
codegen_flags: <defaults>
</compile_context>

<pallas_src>
import jax
import jax.numpy as jnp
from jax.experimental import pallas as pl
from jax.experimental.pallas import tpu as pltpu


def _mish_kernel(x_ref, o_ref):
    x = x_ref[...].astype(jnp.float32)
    xc = jnp.minimum(x, 20.0)            # mish(x) ~= x for x > 20; avoids exp overflow
    e = jnp.exp(xc)                      # single EUP transcendental
    num = e * (e + 2.0)
    den = num + 2.0                      # den >= 2 always
    if jnp.dtype(o_ref.dtype).itemsize >= 4:
        # f32 I/O: EUP vrcp + 1 Newton step -> full f32 accuracy; stays HBM-bound.
        inv = pl.reciprocal(den, approx=True)
        inv = inv * (2.0 - den * inv)
    else:
        # 16-bit I/O: keep EUP at 1 push/element. VPU-only reciprocal:
        # exponent-bit seed (~5% rel err) + 2 Newton steps (~1e-5 rel err),
        # far below bf16/f16 output precision.
        seed_bits = jnp.int32(0x7EF311C3) - pltpu.bitcast(den, jnp.int32)
        inv = pltpu.bitcast(seed_bits, jnp.float32)
        inv = inv * (2.0 - den * inv)
        inv = inv * (2.0 - den * inv)
    y = jnp.where(x > 20.0, x, x * num * inv)
    o_ref[...] = y.astype(o_ref.dtype)


def _round_up(a, b):
    return ((a + b - 1) // b) * b


def mish(x, *, block_bytes=4 * 1024 * 1024, donate_input=False):
    """Element-wise Mish via Pallas. Any shape/dtype; returns same shape/dtype."""
    orig_shape = x.shape
    dtype = x.dtype
    n = x.size
    if n == 0:
        return x

    itemsize = jnp.dtype(dtype).itemsize
    sub_mult = 8 * max(1, 4 // itemsize)     # sublane packing: f32 -> 8, bf16/f16 -> 16

    if n % 128 == 0:
        # Zero-cost reshape to a lane-dense slab: no pad, no trailing slice.
        lane = 128
        for cand in (1024, 512, 256):
            if n % cand == 0:
                lane = cand
                break
        rows = n // lane
        x2d = x.reshape(rows, lane)
        ragged = False
    else:
        # TODO(synk): ragged sizes (rare for NN activations) still take the padded
        # path (+2 HBM passes); in-kernel tail masking via scalar prefetch would
        # remove them.
        lane = 1024
        rows = pl.cdiv(n, lane)
        x2d = jnp.pad(x.reshape(-1), (0, rows * lane - n)).reshape(rows, lane)
        ragged = True

    # Block rows: target ~block_bytes per block, but never more than ceil(rows/2)
    # (rounded up to the sublane packing) so the grid has >= 2 "parallel" steps
    # and both v7x TensorCores get work. block_rows is a multiple of sub_mult or
    # equals rows (both satisfy the (8,128) block constraint).
    max_block_rows = max(sub_mult,
                         (block_bytes // (itemsize * lane)) // sub_mult * sub_mult)
    half_rows = _round_up(pl.cdiv(rows, 2), sub_mult)
    block_rows = min(rows, max_block_rows, half_rows)
    grid = (pl.cdiv(rows, block_rows),)

    out2d = pl.pallas_call(
        _mish_kernel,
        out_shape=jax.ShapeDtypeStruct((rows, lane), dtype),
        grid_spec=pltpu.PrefetchScalarGridSpec(
            num_scalar_prefetch=0,
            grid=grid,
            in_specs=[pl.BlockSpec((block_rows, lane), lambda i: (i, 0))],
            out_specs=pl.BlockSpec((block_rows, lane), lambda i: (i, 0)),
        ),
        compiler_params=pltpu.CompilerParams(
            dimension_semantics=("parallel",),        # megacore sharding on v7x
            vmem_limit_bytes=32 * 1024 * 1024,        # ~16 MiB resident + headroom; safe on v7x
        ),
        input_output_aliases={0: 0} if donate_input else {},
    )(x2d)

    if ragged:
        return out2d.reshape(-1)[:n].reshape(orig_shape)
    return out2d.reshape(orig_shape)


def mish_ref(x):
    xf = x.astype(jnp.float32)
    # numerically stable softplus: max(x,0) + log1p(exp(-|x|))
    sp = jnp.maximum(xf, 0.0) + jnp.log1p(jnp.exp(-jnp.abs(xf)))
    return (xf * jnp.tanh(sp)).astype(x.dtype)


if __name__ == "__main__":
    key = jax.random.PRNGKey(0)
    # NCHW like the PyTorch module would typically see.
    x = jax.random.normal(key, (2, 4, 16, 16), dtype=jnp.float32) * 3.0

    out = mish(x)
    jax.block_until_ready(out)
    ref = mish_ref(x)
    assert out.shape == x.shape and out.dtype == x.dtype
    assert jnp.allclose(out, ref, atol=1e-5, rtol=1e-5)

    # Exercise the 16-bit (VPU-only reciprocal) path as well.
    xb = (jax.random.normal(jax.random.PRNGKey(1), (2, 4, 16, 16)) * 3.0).astype(jnp.bfloat16)
    outb = mish(xb)
    jax.block_until_ready(outb)
    refb = mish_ref(xb)
    assert outb.shape == xb.shape and outb.dtype == jnp.bfloat16
    assert jnp.allclose(outb.astype(jnp.float32), refb.astype(jnp.float32),
                        atol=5e-2, rtol=5e-2)

    print("KERNEL_OK")
</pallas_src>

<mosaic_0001>
module attributes {stable_mosaic.version = 11 : i64} {
  func.func @_mish_kernel(%arg0: i32, %arg1: memref<2x1024xf32, #tpu.memory_space<vmem>>, %arg2: memref<2x1024xf32, #tpu.memory_space<vmem>>) attributes {dimension_semantics = [#tpu.dimension_semantics<parallel>], iteration_bounds = array<i64: 1>, scalar_prefetch = 0 : i64, scratch_operands = 0 : i64, tpu.core_type = #tpu.core_type<tc>, window_params = [{transform_indices = @transform_0, window_bounds = array<i64: 2, 1024>}, {transform_indices = @transform_1, window_bounds = array<i64: 2, 1024>}]} {
    %c0 = arith.constant 0 : index
    %c0_0 = arith.constant 0 : index
    %0 = vector.load %arg1[%c0, %c0_0] : memref<2x1024xf32, #tpu.memory_space<vmem>>, vector<2x1024xf32>
    %cst = arith.constant 2.000000e+01 : f32
    %1 = vector.broadcast %cst : f32 to vector<2x1024xf32>
    %2 = arith.minimumf %0, %1 : vector<2x1024xf32>
    %3 = math.exp %2 : vector<2x1024xf32>
    %cst_1 = arith.constant 2.000000e+00 : f32
    %4 = vector.broadcast %cst_1 : f32 to vector<2x1024xf32>
    %5 = arith.addf %3, %4 : vector<2x1024xf32>
    %6 = arith.mulf %3, %5 : vector<2x1024xf32>
    %cst_2 = arith.constant 2.000000e+00 : f32
    %7 = vector.broadcast %cst_2 : f32 to vector<2x1024xf32>
    %8 = arith.addf %6, %7 : vector<2x1024xf32>
    %9 = tpu.reciprocal %8 {approx = true} : vector<2x1024xf32> -> vector<2x1024xf32>
    %10 = arith.mulf %8, %9 : vector<2x1024xf32>
    %cst_3 = arith.constant 2.000000e+00 : f32
    %11 = vector.broadcast %cst_3 : f32 to vector<2x1024xf32>
    %12 = arith.subf %11, %10 : vector<2x1024xf32>
    %13 = arith.mulf %9, %12 : vector<2x1024xf32>
    %cst_4 = arith.constant 2.000000e+01 : f32
    %14 = vector.broadcast %cst_4 : f32 to vector<2x1024xf32>
    %15 = arith.cmpf ogt, %0, %14 : vector<2x1024xf32>
    %16 = arith.mulf %0, %6 : vector<2x1024xf32>
    %17 = arith.mulf %16, %13 : vector<2x1024xf32>
    %18 = arith.select %15, %0, %17 : vector<2x1024xi1>, vector<2x1024xf32>
    %c0_5 = arith.constant 0 : index
    %c0_6 = arith.constant 0 : index
    %19 = vector.load %arg2[%c0_5, %c0_6] : memref<2x1024xf32, #tpu.memory_space<vmem>>, vector<2x1024xf32>
    tpu.vector_store %arg2[%c0_5, %c0_6], %18 {strides = array<i32>} : memref<2x1024xf32, #tpu.memory_space<vmem>>, vector<2x1024xf32>,
    return
  }
  func.func @transform_0(%arg0: i32) -> (i32, i32) {
    %c0_i32 = arith.constant 0 : i32
    %c0_i32_0 = arith.constant 0 : i32
    return %arg0, %c0_i32 : i32, i32
  }
  func.func @transform_1(%arg0: i32) -> (i32, i32) {
    %c0_i32 = arith.constant 0 : i32
    %c0_i32_0 = arith.constant 0 : i32
    return %arg0, %c0_i32 : i32, i32
  }
}

</mosaic_0001>

<llo_original>
// kernel: tpu_custom_call.1
$region0: #{tpu_custom_call.1}
  #allocation0 [shape = 'u32[]', space=smem, size = 0x4, offset = 0x4, fixed_abs, tag = 'smem constant byte address 0x4 - core index']
  #allocation1 [shape = 'u32[72,128]{1,0:T(1,128)}', space=vmem, size = 0x9000, scoped, tag = 'internal scratch']
  %s0 = inlined_call_operand.hbm [shape: f32[2,1024], index: 0, kind: input, shape index: {}]
  %s1 = inlined_call_operand.hbm [shape: f32[2,1024], index: 1, kind: output, shape index: {}]
  %s2 = sld [smem:[#allocation0]]
  $region18: #{tpu_custom_call.1} parent=0
    _
  %s4 = ssub.s32 1, %s2
  %s5 = scalar_select 0, %s4, %s2
  $region1: #{tpu_custom_call.1} parent=0
    #allocation2 [shape = 'u8[8192]{0}', space=vmem, size = 0x2000, scoped, tag = 'input window, operand 0, single buffered']
    #allocation3 [shape = 's32[1]{0}', space=sflag, size = 0x4, scoped, tag = 'scoped memory for tpu_custom_call.1']
    #allocation4 [shape = 's32[1]{0}', space=sflag, size = 0x4, scoped, tag = 'scoped memory for tpu_custom_call.1']
    #allocation5 [shape = 'u8[8192]{0}', space=vmem, size = 0x2000, scoped, tag = 'output window, operand 0, single buffered']
    %6 = vsyncpa [#allocation3], 0
    %7 = vsyncpa [#allocation4], 0
    // Predicated region
    $region2: #{tpu_custom_call.1} parent=1 // pred_check
      _
    $region3: #{tpu_custom_call.1} parent=1 // pred_check_branch
      %9 = sbr.rel (0) target = $region5
    $region4: #{tpu_custom_call.1} parent=1 // pred_region
      %11 = vsyncadd [#allocation3], 0
      %s13 = sshll.u32 %s0, 4
      %s14 = int_to_ptr.hbm [resolvable:$true] %s13
      %s15 = sshll.u32 [#allocation2], 4
      %s16 = int_to_ptr.vmem [resolvable:$true] %s15
      %18 = dma.hbm_to_vmem [thread:$0]  %s14, 256, %s16, [#allocation3]
    $region5: #{tpu_custom_call.1} parent=1 // pred_fallthru
      _
    // Predicated region
    $region6: #{tpu_custom_call.1} parent=1 // pred_check
      _
    $region7: #{tpu_custom_call.1} parent=1 // pred_check_branch
      %20 = sbr.rel (0) target = $region9
    $region8: #{tpu_custom_call.1} parent=1 // pred_region
      %22 = dma.done [#allocation3], 256
    $region9: #{tpu_custom_call.1} parent=1 // pred_fallthru
      _
    %v23 = vld [vmem:[#allocation2] sm:$0xff]
    %v24 = vld [vmem:[#allocation2 + $0x8] sm:$0xff]
    %v25 = vmin.f32 %v23, 20.0
    %v26 = vmin.f32 %v24, 20.0
    %v27 = vmul.f32 %v25, 1.442695
    %v28 = vpow.pop %v27
    %v29 = vmul.f32 %v26, 1.442695
    %v30 = vpow.pop %v29
    %v31 = vadd.f32 %v28, 2.0
    %v32 = vadd.f32 %v30, 2.0
    %v33 = vmul.f32 %v28, %v31
    %v34 = vmul.f32 %v30, %v32
    %v35 = vadd.f32 %v33, 2.0
    %v36 = vadd.f32 %v34, 2.0
    %v37 = vrcp.pop %v35
    %v38 = vrcp.pop %v36
    %v39 = vmul.f32 %v35, %v37
    %v40 = vmul.f32 %v36, %v38
    %v41 = vsub.f32 2.0, %v39
    %v42 = vsub.f32 2.0, %v40
    %v43 = vmul.f32 %v37, %v41
    %v44 = vmul.f32 %v38, %v42
    %vm45 = vcmp.gt.f32.partialorder %v23, 20.0
    %vm46 = vcmp.gt.f32.partialorder %v24, 20.0
    %v47 = vmul.f32 %v23, %v33
    %v48 = vmul.f32 %v24, %v34
    %v49 = vmul.f32 %v47, %v43
    %v50 = vmul.f32 %v48, %v44
    %v51 = vsel %vm45, %v23, %v49
    %v52 = vsel %vm46, %v24, %v50
    %53 = vst [vmem:[#allocation5] sm:$0xff] %v51
    %54 = vst [vmem:[#allocation5 + $0x8] sm:$0xff] %v52
    // Predicated region
    $region10: #{tpu_custom_call.1} parent=1 // pred_check
      _
    $region11: #{tpu_custom_call.1} parent=1 // pred_check_branch
      %56 = sbr.rel (0) target = $region13
    $region12: #{tpu_custom_call.1} parent=1 // pred_region
      %58 = vsyncadd [#allocation4], 0
      %s60 = sshll.u32 [#allocation5], 4
      %s61 = int_to_ptr.vmem [resolvable:$true] %s60
      %s62 = sshll.u32 %s1, 4
      %s63 = int_to_ptr.hbm [resolvable:$true] %s62
      %65 = dma.vmem_to_hbm [thread:$0]  %s61, 256, %s63, [#allocation4]
    $region13: #{tpu_custom_call.1} parent=1 // pred_fallthru
      _
    // Predicated region
    $region14: #{tpu_custom_call.1} parent=1 // pred_check
      _
    $region15: #{tpu_custom_call.1} parent=1 // pred_check_branch
      %67 = sbr.rel (0) target = $region17
    $region16: #{tpu_custom_call.1} parent=1 // pred_region
      %69 = dma.done [#allocation4], 256
    $region17: #{tpu_custom_call.1} parent=1 // pred_fallthru
      _
    %70 = vsyncpa [#allocation3], 1
    %71 = vsyncpa [#allocation4], 1

</llo_original>
